<compile_context>
chip_gen: v6e
topology: v6e:2x2x1
jax: 0.10.0
libtpu: 0.0.40
codegen_flags: <defaults>
</compile_context>

<pallas_src>
import functools

import jax
import jax.numpy as jnp
from jax.experimental import pallas as pl
from jax.experimental.pallas import tpu as pltpu


def _round_up(x, m):
    return ((x + m - 1) // m) * m


def _mlp_kernel(x_ref, w1_ref, b1_ref, w2_ref, b2_ref, w3_ref, b3_ref, o_ref):
    """Fused 3-layer MLP for one batch tile.

    Matmul operands are bf16 (MXU) with f32 accumulation; bias add + ReLU run in f32 on the VPU.
    """
    x = x_ref[...]
    h1 = jnp.dot(x, w1_ref[...], preferred_element_type=jnp.float32) + b1_ref[...]
    h1 = jnp.maximum(h1, 0.0).astype(w2_ref.dtype)
    h2 = jnp.dot(h1, w2_ref[...], preferred_element_type=jnp.float32) + b2_ref[...]
    h2 = jnp.maximum(h2, 0.0).astype(w3_ref.dtype)
    out = jnp.dot(h2, w3_ref[...], preferred_element_type=jnp.float32) + b3_ref[...]
    o_ref[...] = out.astype(o_ref.dtype)


@functools.partial(jax.jit, static_argnames=("block_m", "compute_dtype"))
def mlp_classifier_forward(x, w1, b1, w2, b2, w3, b3, *, block_m=512,
                           compute_dtype=jnp.bfloat16):
    """x: (B, x_dim) f32. Weights: (in, out). Biases: (out,) or (1, out). Returns (B, out_dim)."""
    B, x_dim = x.shape
    h1_dim = w1.shape[1]
    h2_dim = w2.shape[1]
    out_dim = w3.shape[1]

    f32 = jnp.float32
    cd = compute_dtype

    # ---- lane / MXU friendly padded dims (multiples of 128 on the lane axis) ----
    k1 = _round_up(x_dim, 128)       # full MXU contraction depth for layer 1
    h1p = _round_up(h1_dim, 128)
    h2p = _round_up(h2_dim, 128)
    outp = _round_up(out_dim, 128)   # lane-dense output -> unmasked full-width stores

    # ---- batch tile: big tiles for MXU occupancy; keep >=2 grid steps when possible (v7x 2 TCs) ----
    bm = min(block_m, _round_up(B, 8))
    if B > 8 and _round_up(B, bm) // bm < 2:
        bm = max(8, _round_up((B + 1) // 2, 8))
    b_pad = _round_up(B, bm)

    # Zero padding preserves the math exactly (pad rows/cols contribute 0, pad biases are 0).
    xp = jnp.pad(x.astype(cd), ((0, b_pad - B), (0, k1 - x_dim)))
    w1p = jnp.pad(w1, ((0, k1 - x_dim), (0, h1p - h1_dim))).astype(cd)
    b1p = jnp.pad(b1.reshape(1, -1).astype(f32), ((0, 0), (0, h1p - h1_dim)))
    w2p = jnp.pad(w2, ((0, h1p - h1_dim), (0, h2p - h2_dim))).astype(cd)
    b2p = jnp.pad(b2.reshape(1, -1).astype(f32), ((0, 0), (0, h2p - h2_dim)))
    w3p = jnp.pad(w3, ((0, h2p - h2_dim), (0, outp - out_dim))).astype(cd)
    b3p = jnp.pad(b3.reshape(1, -1).astype(f32), ((0, 0), (0, outp - out_dim)))

    grid = (b_pad // bm,)

    in_specs = [
        pl.BlockSpec((bm, k1), lambda i: (i, 0)),      # activations: march over batch
        pl.BlockSpec((k1, h1p), lambda i: (0, 0)),     # weights / biases stay resident
        pl.BlockSpec((1, h1p), lambda i: (0, 0)),
        pl.BlockSpec((h1p, h2p), lambda i: (0, 0)),
        pl.BlockSpec((1, h2p), lambda i: (0, 0)),
        pl.BlockSpec((h2p, outp), lambda i: (0, 0)),
        pl.BlockSpec((1, outp), lambda i: (0, 0)),
    ]
    out_specs = pl.BlockSpec((bm, outp), lambda i: (i, 0))

    def _nbytes(a):
        return a.size * a.dtype.itemsize

    flops = 2 * b_pad * (k1 * h1p + h1p * h2p + h2p * outp)
    bytes_accessed = (_nbytes(xp) + _nbytes(w1p) + _nbytes(b1p) + _nbytes(w2p)
                      + _nbytes(b2p) + _nbytes(w3p) + _nbytes(b3p)
                      + b_pad * outp * 4)

    out_padded = pl.pallas_call(
        _mlp_kernel,
        out_shape=jax.ShapeDtypeStruct((b_pad, outp), jnp.float32),
        grid_spec=pltpu.PrefetchScalarGridSpec(
            num_scalar_prefetch=0,
            grid=grid,
            in_specs=in_specs,
            out_specs=out_specs,
        ),
        compiler_params=pltpu.CompilerParams(
            dimension_semantics=("parallel",),
            vmem_limit_bytes=48 * 1024 * 1024,
        ),
        cost_estimate=pl.CostEstimate(
            flops=flops, transcendentals=0, bytes_accessed=bytes_accessed),
    )(xp, w1p, b1p, w2p, b2p, w3p, b3p)

    return out_padded[:B, :out_dim].astype(x.dtype)


def init_params(key, x_dim, h_dim1=256, h_dim2=256, out_dim=20, dtype=jnp.float32):
    """Deterministic init mimicking nn.Linear (uniform(-1/sqrt(fan_in), 1/sqrt(fan_in))).

    Weights are returned already transposed to (in, out) for the kernel layout.
    """
    keys = jax.random.split(key, 6)

    def linear(kw, kb, fan_in, fan_out):
        bound = 1.0 / jnp.sqrt(jnp.asarray(fan_in, dtype))
        w = jax.random.uniform(kw, (fan_in, fan_out), dtype, -bound, bound)
        b = jax.random.uniform(kb, (1, fan_out), dtype, -bound, bound)
        return w, b

    w1, b1 = linear(keys[0], keys[1], x_dim, h_dim1)
    w2, b2 = linear(keys[2], keys[3], h_dim1, h_dim2)
    w3, b3 = linear(keys[4], keys[5], h_dim2, out_dim)
    return w1, b1, w2, b2, w3, b3


def _reference_forward_f32(x, w1, b1, w2, b2, w3, b3):
    h1 = jnp.maximum(x @ w1 + b1, 0.0)
    h2 = jnp.maximum(h1 @ w2 + b2, 0.0)
    return h2 @ w3 + b3


def _reference_forward_mixed(x, w1, b1, w2, b2, w3, b3, compute_dtype=jnp.bfloat16):
    cd = compute_dtype
    h1 = jnp.maximum(
        jnp.dot(x.astype(cd), w1.astype(cd), preferred_element_type=jnp.float32) + b1, 0.0)
    h2 = jnp.maximum(
        jnp.dot(h1.astype(cd), w2.astype(cd), preferred_element_type=jnp.float32) + b2, 0.0)
    return jnp.dot(h2.astype(cd), w3.astype(cd), preferred_element_type=jnp.float32) + b3


if __name__ == "__main__":
    key = jax.random.PRNGKey(0)
    k_x, k_p = jax.random.split(key)

    B, x_dim = 16, 64            # small synthetic shapes consistent with the module
    h_dim1, h_dim2, out_dim = 256, 256, 20

    x = jax.random.normal(k_x, (B, x_dim), jnp.float32)
    params = init_params(k_p, x_dim, h_dim1, h_dim2, out_dim)

    out = mlp_classifier_forward(x, *params)
    out = jax.block_until_ready(out)
    assert out.shape == (B, out_dim)

    ref_mixed = _reference_forward_mixed(x, *params)   # same bf16-operand / f32-acc path
    ref_f32 = _reference_forward_f32(x, *params)       # full-precision PyTorch-equivalent path
    assert jnp.allclose(out, ref_mixed, atol=1e-2, rtol=1e-2), "mismatch vs bf16/f32 reference"
    assert jnp.allclose(out, ref_f32, atol=1e-1, rtol=1e-1), "mismatch vs f32 reference"

    print("KERNEL_OK")
</pallas_src>

<mosaic_0001>
module attributes {stable_mosaic.version = 11 : i64} {
  func.func @_mlp_kernel(%arg0: i32, %arg1: memref<8x128xbf16, #tpu.memory_space<vmem>>, %arg2: memref<128x256xbf16, #tpu.memory_space<vmem>>, %arg3: memref<1x256xf32, #tpu.memory_space<vmem>>, %arg4: memref<256x256xbf16, #tpu.memory_space<vmem>>, %arg5: memref<1x256xf32, #tpu.memory_space<vmem>>, %arg6: memref<256x128xbf16, #tpu.memory_space<vmem>>, %arg7: memref<1x128xf32, #tpu.memory_space<vmem>>, %arg8: memref<8x128xf32, #tpu.memory_space<vmem>>) attributes {dimension_semantics = [#tpu.dimension_semantics<parallel>], iteration_bounds = array<i64: 2>, scalar_prefetch = 0 : i64, scratch_operands = 0 : i64, tpu.core_type = #tpu.core_type<tc>, window_params = [{transform_indices = @transform_0, window_bounds = array<i64: 8, 128>}, {pipeline_mode = #tpu.pipeline_mode<synchronous>, transform_indices = @transform_1, window_bounds = array<i64: 128, 256>}, {pipeline_mode = #tpu.pipeline_mode<synchronous>, transform_indices = @transform_2, window_bounds = array<i64: 1, 256>}, {pipeline_mode = #tpu.pipeline_mode<synchronous>, transform_indices = @transform_3, window_bounds = array<i64: 256, 256>}, {pipeline_mode = #tpu.pipeline_mode<synchronous>, transform_indices = @transform_4, window_bounds = array<i64: 1, 256>}, {pipeline_mode = #tpu.pipeline_mode<synchronous>, transform_indices = @transform_5, window_bounds = array<i64: 256, 128>}, {pipeline_mode = #tpu.pipeline_mode<synchronous>, transform_indices = @transform_6, window_bounds = array<i64: 1, 128>}, {transform_indices = @transform_7, window_bounds = array<i64: 8, 128>}]} {
    %c0 = arith.constant 0 : index
    %c0_0 = arith.constant 0 : index
    %0 = vector.load %arg1[%c0, %c0_0] : memref<8x128xbf16, #tpu.memory_space<vmem>>, vector<8x128xbf16>
    %c0_1 = arith.constant 0 : index
    %c0_2 = arith.constant 0 : index
    %1 = vector.load %arg2[%c0_1, %c0_2] : memref<128x256xbf16, #tpu.memory_space<vmem>>, vector<128x256xbf16>
    %cst = arith.constant dense<0.000000e+00> : vector<8x256xf32>
    %2 = tpu.matmul %0, %1, %cst {dimension_numbers = #tpu.dot_dimension_numbers<[1], [0], [0], [1], [0, 0, 1, 1], [], []>} : vector<8x128xbf16>, vector<128x256xbf16>, vector<8x256xf32> -> vector<8x256xf32>
    %c0_3 = arith.constant 0 : index
    %c0_4 = arith.constant 0 : index
    %3 = vector.load %arg3[%c0_3, %c0_4] : memref<1x256xf32, #tpu.memory_space<vmem>>, vector<1x256xf32>
    %4 = vector.broadcast %3 : vector<1x256xf32> to vector<8x256xf32>
    %5 = arith.addf %2, %4 : vector<8x256xf32>
    %cst_5 = arith.constant 0.000000e+00 : f32
    %6 = vector.broadcast %cst_5 : f32 to vector<8x256xf32>
    %7 = arith.maximumf %5, %6 : vector<8x256xf32>
    %8 = arith.truncf %7 : vector<8x256xf32> to vector<8x256xbf16>
    %c0_6 = arith.constant 0 : index
    %c0_7 = arith.constant 0 : index
    %9 = vector.load %arg4[%c0_6, %c0_7] : memref<256x256xbf16, #tpu.memory_space<vmem>>, vector<256x256xbf16>
    %cst_8 = arith.constant dense<0.000000e+00> : vector<8x256xf32>
    %10 = tpu.matmul %8, %9, %cst_8 {dimension_numbers = #tpu.dot_dimension_numbers<[1], [0], [0], [1], [0, 0, 1, 1], [], []>} : vector<8x256xbf16>, vector<256x256xbf16>, vector<8x256xf32> -> vector<8x256xf32>
    %c0_9 = arith.constant 0 : index
    %c0_10 = arith.constant 0 : index
    %11 = vector.load %arg5[%c0_9, %c0_10] : memref<1x256xf32, #tpu.memory_space<vmem>>, vector<1x256xf32>
    %12 = vector.broadcast %11 : vector<1x256xf32> to vector<8x256xf32>
    %13 = arith.addf %10, %12 : vector<8x256xf32>
    %cst_11 = arith.constant 0.000000e+00 : f32
    %14 = vector.broadcast %cst_11 : f32 to vector<8x256xf32>
    %15 = arith.maximumf %13, %14 : vector<8x256xf32>
    %16 = arith.truncf %15 : vector<8x256xf32> to vector<8x256xbf16>
    %c0_12 = arith.constant 0 : index
    %c0_13 = arith.constant 0 : index
    %17 = vector.load %arg6[%c0_12, %c0_13] : memref<256x128xbf16, #tpu.memory_space<vmem>>, vector<256x128xbf16>
    %cst_14 = arith.constant dense<0.000000e+00> : vector<8x128xf32>
    %18 = tpu.matmul %16, %17, %cst_14 {dimension_numbers = #tpu.dot_dimension_numbers<[1], [0], [0], [1], [0, 0, 1, 1], [], []>} : vector<8x256xbf16>, vector<256x128xbf16>, vector<8x128xf32> -> vector<8x128xf32>
    %c0_15 = arith.constant 0 : index
    %c0_16 = arith.constant 0 : index
    %19 = vector.load %arg7[%c0_15, %c0_16] : memref<1x128xf32, #tpu.memory_space<vmem>>, vector<1x128xf32>
    %20 = vector.broadcast %19 : vector<1x128xf32> to vector<8x128xf32>
    %21 = arith.addf %18, %20 : vector<8x128xf32>
    %c0_17 = arith.constant 0 : index
    %c0_18 = arith.constant 0 : index
    %22 = vector.load %arg8[%c0_17, %c0_18] : memref<8x128xf32, #tpu.memory_space<vmem>>, vector<8x128xf32>
    tpu.vector_store %arg8[%c0_17, %c0_18], %21 {strides = array<i32>} : memref<8x128xf32, #tpu.memory_space<vmem>>, vector<8x128xf32>,
    return
  }
  func.func @transform_0(%arg0: i32) -> (i32, i32) {
    %c0_i32 = arith.constant 0 : i32
    %c0_i32_0 = arith.constant 0 : i32
    return %arg0, %c0_i32 : i32, i32
  }
  func.func @transform_1(%arg0: i32) -> (i32, i32) {
    %c0_i32 = arith.constant 0 : i32
    %c0_i32_0 = arith.constant 0 : i32
    %c0_i32_1 = arith.constant 0 : i32
    return %c0_i32, %c0_i32_0 : i32, i32
  }
  func.func @transform_2(%arg0: i32) -> (i32, i32) {
    %c0_i32 = arith.constant 0 : i32
    %c0_i32_0 = arith.constant 0 : i32
    %c0_i32_1 = arith.constant 0 : i32
    return %c0_i32, %c0_i32_0 : i32, i32
  }
  func.func @transform_3(%arg0: i32) -> (i32, i32) {
    %c0_i32 = arith.constant 0 : i32
    %c0_i32_0 = arith.constant 0 : i32
    %c0_i32_1 = arith.constant 0 : i32
    return %c0_i32, %c0_i32_0 : i32, i32
  }
  func.func @transform_4(%arg0: i32) -> (i32, i32) {
    %c0_i32 = arith.constant 0 : i32
    %c0_i32_0 = arith.constant 0 : i32
    %c0_i32_1 = arith.constant 0 : i32
    return %c0_i32, %c0_i32_0 : i32, i32
  }
  func.func @transform_5(%arg0: i32) -> (i32, i32) {
    %c0_i32 = arith.constant 0 : i32
    %c0_i32_0 = arith.constant 0 : i32
    %c0_i32_1 = arith.constant 0 : i32
    return %c0_i32, %c0_i32_0 : i32, i32
  }
  func.func @transform_6(%arg0: i32) -> (i32, i32) {
    %c0_i32 = arith.constant 0 : i32
    %c0_i32_0 = arith.constant 0 : i32
    %c0_i32_1 = arith.constant 0 : i32
    return %c0_i32, %c0_i32_0 : i32, i32
  }
  func.func @transform_7(%arg0: i32) -> (i32, i32) {
    %c0_i32 = arith.constant 0 : i32
    %c0_i32_0 = arith.constant 0 : i32
    return %arg0, %c0_i32 : i32, i32
  }
}

</mosaic_0001>

<llo_original>
// kernel: mlp_classifier_forward.1
$region0: #{mlp_classifier_forward.1}
  #allocation0 [shape = 'u32[]', space=smem, size = 0x4, offset = 0x4, fixed_abs, tag = 'smem constant byte address 0x4 - core index']
  #allocation1 [shape = 'u32[144,128]{1,0:T(1,128)}', space=vmem, size = 0x12000, scoped, tag = 'internal scratch']
  %s0 = inlined_call_operand.vmem [shape: bf16[16,128], index: 0, kind: input, shape index: {}]
  %s1 = inlined_call_operand.vmem [shape: bf16[128,256], index: 1, kind: input, shape index: {}]
  %s2 = inlined_call_operand.vmem [shape: f32[1,256], index: 2, kind: input, shape index: {}]
  %s3 = inlined_call_operand.vmem [shape: bf16[256,256], index: 3, kind: input, shape index: {}]
  %s4 = inlined_call_operand.vmem [shape: f32[1,256], index: 4, kind: input, shape index: {}]
  %s5 = inlined_call_operand.vmem [shape: bf16[256,128], index: 5, kind: input, shape index: {}]
  %s6 = inlined_call_operand.vmem [shape: f32[1,128], index: 6, kind: input, shape index: {}]
  %s7 = inlined_call_operand.hbm [shape: f32[16,128], index: 7, kind: output, shape index: {}]
  %s8 = sld [smem:[#allocation0]]
  $region61: #{mlp_classifier_forward.1} parent=0
    _
  %s10 = ssub.s32 1, %s8
  %s11 = scalar_select 0, %s10, %s8
  $region1: #{mlp_classifier_forward.1} parent=0
    #allocation2 [shape = 'u8[8192]{0}', space=vmem, size = 0x2000, scoped, tag = 'output window, operand 0']
    #allocation3 [shape = 's32[2]{0}', space=sflag, size = 0x8, scoped, tag = 'scoped memory for mlp_classifier_forward.1']
    %12 = vsyncpa [#allocation3], 0
    %s13 = scalar_lea.sflag [#allocation3], 1
    %14 = vsyncpa %s13, 0
    loop: start=0, step=1, limit=4
    $region2: #{mlp_classifier_forward.1} parent=1 // loop_pre_header
      _
    $region3: #{mlp_classifier_forward.1} parent=1 // loop_header
      %s16 = sphi 0, %s20
      %p17 = scmp.ge.s32.totalorder %s16, 4
      %s26 = sphi 0, %s28
      %s29 = sphi 0, %s26
      %s30 = sphi 0, %s29
      %s46 = sphi 0, %s30
      %s50 = sphi 0, %s50
      %s52 = sphi 0, %s50
      %s53 = sphi 0, %s52
      %s67 = sphi 0, %s53
      %s71 = sphi 0, %s71
      %s73 = sphi 0, %s71
      %s74 = sphi 0, %s73
      %s88 = sphi 0, %s74
      %s92 = sphi 0, %s92
      %s94 = sphi 0, %s92
      %s95 = sphi 0, %s94
      %s109 = sphi 0, %s95
      %s113 = sphi 0, %s113
      %s115 = sphi 0, %s113
      %s116 = sphi 0, %s115
      %s130 = sphi 0, %s116
      %s134 = sphi 0, %s134
      %s136 = sphi 0, %s134
      %s137 = sphi 0, %s136
      %s151 = sphi 0, %s137
      %s155 = sphi 0, %s155
      %s157 = sphi 0, %s155
      %s158 = sphi 0, %s157
      %s172 = sphi 0, %s158
      %s178 = sphi 0, %s180
      %s181 = sphi 0, %s178
      %s182 = sphi 0, %s181
      %s198 = sphi 0, %s182
    $region4: #{mlp_classifier_forward.1} parent=1 // loop_header_branch
      %19 = sbr.rel (%p17) target = $region8
    $region5: #{mlp_classifier_forward.1} parent=1 // loop_body
      %s21 = ssub.s32 %s16, 1
      %s22 = ssub.s32 %s16, 2
      %s23 = sadd.s32 %s16, 1
      %s24 = ssub.s32 %s16, %s23
      %p25 = scmp.eq.s32.totalorder %s24, 0
      %s27 = sadd.s32 %s26, 1
      %s28 = scalar_select %p25, %s26, %s27
      %p31 = pneg %p25
      %p32 = scmp.eq.s32.totalorder %s16, 1
      %p33 = por %p31, %p32
      %p34 = scmp.ne.s32.totalorder %s26, %s29
      %p35 = scmp.eq.s32.totalorder %s16, 0
      %p36 = por %p34, %p35
      %p37 = scmp.ne.s32.totalorder %s26, %s29
      %p38 = scmp.eq.s32.totalorder %s21, 1
      %p39 = por %p37, %p38
      %p40 = scmp.ne.s32.totalorder %s29, %s30
      %p41 = scmp.eq.s32.totalorder %s21, 0
      %p42 = por %p40, %p41
      %p43 = scmp.ne.s32.totalorder %s29, %s30
      %p44 = scmp.eq.s32.totalorder %s22, 1
      %p45 = por %p43, %p44
      %p47 = scmp.ne.s32.totalorder %s30, %s46
      %p48 = scmp.eq.s32.totalorder %s22, 0
      %p49 = por %p47, %p48
      %s51 = sadd.s32 %s50, 1
      %p54 = scmp.eq.s32.totalorder %s16, 1
      %p55 = scmp.ne.s32.totalorder %s50, %s52
      %p56 = scmp.eq.s32.totalorder %s16, 0
      %p57 = por %p55, %p56
      %p58 = scmp.ne.s32.totalorder %s50, %s52
      %p59 = scmp.eq.s32.totalorder %s21, 1
      %p60 = por %p58, %p59
      %p61 = scmp.ne.s32.totalorder %s52, %s53
      %p62 = scmp.eq.s32.totalorder %s21, 0
      %p63 = por %p61, %p62
      %p64 = scmp.ne.s32.totalorder %s52, %s53
      %p65 = scmp.eq.s32.totalorder %s22, 1
      %p66 = por %p64, %p65
      %p68 = scmp.ne.s32.totalorder %s53, %s67
      %p69 = scmp.eq.s32.totalorder %s22, 0
      %p70 = por %p68, %p69
      %s72 = sadd.s32 %s71, 1
      %p75 = scmp.eq.s32.totalorder %s16, 1
      %p76 = scmp.ne.s32.totalorder %s71, %s73
      %p77 = scmp.eq.s32.totalorder %s16, 0
      %p78 = por %p76, %p77
      %p79 = scmp.ne.s32.totalorder %s71, %s73
      %p80 = scmp.eq.s32.totalorder %s21, 1
      %p81 = por %p79, %p80
      %p82 = scmp.ne.s32.totalorder %s73, %s74
      %p83 = scmp.eq.s32.totalorder %s21, 0
      %p84 = por %p82, %p83
      %p85 = scmp.ne.s32.totalorder %s73, %s74
      %p86 = scmp.eq.s32.totalorder %s22, 1
      %p87 = por %p85, %p86
      %p89 = scmp.ne.s32.totalorder %s74, %s88
      %p90 = scmp.eq.s32.totalorder %s22, 0
      %p91 = por %p89, %p90
      %s93 = sadd.s32 %s92, 1
      %p96 = scmp.eq.s32.totalorder %s16, 1
      %p97 = scmp.ne.s32.totalorder %s92, %s94
      %p98 = scmp.eq.s32.totalorder %s16, 0
      %p99 = por %p97, %p98
      %p100 = scmp.ne.s32.totalorder %s92, %s94
      %p101 = scmp.eq.s32.totalorder %s21, 1
      %p102 = por %p100, %p101
      %p103 = scmp.ne.s32.totalorder %s94, %s95
      %p104 = scmp.eq.s32.totalorder %s21, 0
      %p105 = por %p103, %p104
      %p106 = scmp.ne.s32.totalorder %s94, %s95
      %p107 = scmp.eq.s32.totalorder %s22, 1
      %p108 = por %p106, %p107
      %p110 = scmp.ne.s32.totalorder %s95, %s109
      %p111 = scmp.eq.s32.totalorder %s22, 0
      %p112 = por %p110, %p111
      %s114 = sadd.s32 %s113, 1
      %p117 = scmp.eq.s32.totalorder %s16, 1
      %p118 = scmp.ne.s32.totalorder %s113, %s115
      %p119 = scmp.eq.s32.totalorder %s16, 0
      %p120 = por %p118, %p119
      %p121 = scmp.ne.s32.totalorder %s113, %s115
      %p122 = scmp.eq.s32.totalorder %s21, 1
      %p123 = por %p121, %p122
      %p124 = scmp.ne.s32.totalorder %s115, %s116
      %p125 = scmp.eq.s32.totalorder %s21, 0
      %p126 = por %p124, %p125
      %p127 = scmp.ne.s32.totalorder %s115, %s116
      %p128 = scmp.eq.s32.totalorder %s22, 1
      %p129 = por %p127, %p128
      %p131 = scmp.ne.s32.totalorder %s116, %s130
      %p132 = scmp.eq.s32.totalorder %s22, 0
      %p133 = por %p131, %p132
      %s135 = sadd.s32 %s134, 1
      %p138 = scmp.eq.s32.totalorder %s16, 1
      %p139 = scmp.ne.s32.totalorder %s134, %s136
      %p140 = scmp.eq.s32.totalorder %s16, 0
      %p141 = por %p139, %p140
      %p142 = scmp.ne.s32.totalorder %s134, %s136
      %p143 = scmp.eq.s32.totalorder %s21, 1
      %p144 = por %p142, %p143
      %p145 = scmp.ne.s32.totalorder %s136, %s137
      %p146 = scmp.eq.s32.totalorder %s21, 0
      %p147 = por %p145, %p146
      %p148 = scmp.ne.s32.totalorder %s136, %s137
      %p149 = scmp.eq.s32.totalorder %s22, 1
      %p150 = por %p148, %p149
      %p152 = scmp.ne.s32.totalorder %s137, %s151
      %p153 = scmp.eq.s32.totalorder %s22, 0
      %p154 = por %p152, %p153
      %s156 = sadd.s32 %s155, 1
      %p159 = scmp.eq.s32.totalorder %s16, 1
      %p160 = scmp.ne.s32.totalorder %s155, %s157
      %p161 = scmp.eq.s32.totalorder %s16, 0
      %p162 = por %p160, %p161
      %p163 = scmp.ne.s32.totalorder %s155, %s157
      %p164 = scmp.eq.s32.totalorder %s21, 1
      %p165 = por %p163, %p164
      %p166 = scmp.ne.s32.totalorder %s157, %s158
      %p167 = scmp.eq.s32.totalorder %s21, 0
      %p168 = por %p166, %p167
      %p169 = scmp.ne.s32.totalorder %s157, %s158
      %p170 = scmp.eq.s32.totalorder %s22, 1
      %p171 = por %p169, %p170
      %p173 = scmp.ne.s32.totalorder %s158, %s172
      %p174 = scmp.eq.s32.totalorder %s22, 0
      %p175 = por %p173, %p174
      %s176 = ssub.s32 %s16, %s23
      %p177 = scmp.eq.s32.totalorder %s176, 0
      %s179 = sadd.s32 %s178, 1
      %s180 = scalar_select %p177, %s178, %s179
      %p183 = pneg %p177
      %p184 = scmp.eq.s32.totalorder %s16, 1
      %p185 = por %p183, %p184
      %p186 = scmp.ne.s32.totalorder %s178, %s181
      %p187 = scmp.eq.s32.totalorder %s16, 0
      %p188 = por %p186, %p187
      %p189 = scmp.ne.s32.totalorder %s178, %s181
      %p190 = scmp.eq.s32.totalorder %s21, 1
      %p191 = por %p189, %p190
      %p192 = scmp.ne.s32.totalorder %s181, %s182
      %p193 = scmp.eq.s32.totalorder %s21, 0
      %p194 = por %p192, %p193
      %p195 = scmp.ne.s32.totalorder %s181, %s182
      %p196 = scmp.eq.s32.totalorder %s22, 1
      %p197 = por %p195, %p196
      %p199 = scmp.ne.s32.totalorder %s182, %s198
      %p200 = scmp.eq.s32.totalorder %s22, 0
      %p201 = por %p199, %p200
      %p202 = scmp.le.s32.totalorder 1, %s16
      %p203 = scmp.lt.s32.totalorder %s16, 3
      %p204 = pnand %p202, %p203
      %p205 = pneg %p204
      // Predicated region
      $region9: #{mlp_classifier_forward.1} parent=5 // pred_check
        _
      $region10: #{mlp_classifier_forward.1} parent=5 // pred_check_branch
        %207 = sbr.rel (%p204) target = $region12
      $region11: #{mlp_classifier_forward.1} parent=5 // pred_region
        %s208 = ssub.s32 %s16, 1
        // Predicated region
        $region13: #{mlp_classifier_forward.1} parent=11 // pred_check
          %p209 = pneg %p63
        $region14: #{mlp_classifier_forward.1} parent=11 // pred_check_branch
          %211 = sbr.rel (%p209) target = $region16
        $region15: #{mlp_classifier_forward.1} parent=11 // pred_region
          _
        $region16: #{mlp_classifier_forward.1} parent=11 // pred_fallthru
          _
        // Predicated region
        $region17: #{mlp_classifier_forward.1} parent=11 // pred_check
          %p212 = pneg %p84
        $region18: #{mlp_classifier_forward.1} parent=11 // pred_check_branch
          %214 = sbr.rel (%p212) target = $region20
        $region19: #{mlp_classifier_forward.1} parent=11 // pred_region
          _
        $region20: #{mlp_classifier_forward.1} parent=11 // pred_fallthru
          _
        // Predicated region
        $region21: #{mlp_classifier_forward.1} parent=11 // pred_check
          %p215 = pneg %p105
        $region22: #{mlp_classifier_forward.1} parent=11 // pred_check_branch
          %217 = sbr.rel (%p215) target = $region24
        $region23: #{mlp_classifier_forward.1} parent=11 // pred_region
          _
        $region24: #{mlp_classifier_forward.1} parent=11 // pred_fallthru
          _
        // Predicated region
        $region25: #{mlp_classifier_forward.1} parent=11 // pred_check
          %p218 = pneg %p126
        $region26: #{mlp_classifier_forward.1} parent=11 // pred_check_branch
          %220 = sbr.rel (%p218) target = $region28
        $region27: #{mlp_classifier_forward.1} parent=11 // pred_region
          _
        $region28: #{mlp_classifier_forward.1} parent=11 // pred_fallthru
          _
        // Predicated region
        $region29: #{mlp_classifier_forward.1} parent=11 // pred_check
          %p221 = pneg %p147
        $region30: #{mlp_classifier_forward.1} parent=11 // pred_check_branch
          %223 = sbr.rel (%p221) target = $region32
        $region31: #{mlp_classifier_forward.1} parent=11 // pred_region
          _
        $region32: #{mlp_classifier_forward.1} parent=11 // pred_fallthru
          _
        // Predicated region
        $region33: #{mlp_classifier_forward.1} parent=11 // pred_check
          %p224 = pneg %p168
        $region34: #{mlp_classifier_forward.1} parent=11 // pred_check_branch
          %226 = sbr.rel (%p224) target = $region36
        $region35: #{mlp_classifier_forward.1} parent=11 // pred_region
          _
        $region36: #{mlp_classifier_forward.1} parent=11 // pred_fallthru
          _
      $region12: #{mlp_classifier_forward.1} parent=5 // pred_fallthru
        _
      %p227 = scmp.lt.s32.totalorder %s16, 2
      // Predicated region
      $region37: #{mlp_classifier_forward.1} parent=5 // pred_check
        %p228 = pneg %p227
      $region38: #{mlp_classifier_forward.1} parent=5 // pred_check_branch
        %230 = sbr.rel (%p228) target = $region40
      $region39: #{mlp_classifier_forward.1} parent=5 // pred_region
        // Predicated region
        $region41: #{mlp_classifier_forward.1} parent=39 // pred_check
          %p231 = pneg %p36
        $region42: #{mlp_classifier_forward.1} parent=39 // pred_check_branch
          %233 = sbr.rel (%p231) target = $region44
        $region43: #{mlp_classifier_forward.1} parent=39 // pred_region
          %p234 = scmp.lt.s32.totalorder %s16, 1
          %s235 = scalar_select %p234, %s16, 1
          %s236 = smul.addr %s235, 4
          %s237 = scalar_lea.vmem %s0, %s236
        $region44: #{mlp_classifier_forward.1} parent=39 // pred_fallthru
          _
      $region40: #{mlp_classifier_forward.1} parent=5 // pred_fallthru
        _
      %p238 = scmp.le.s32.totalorder 1, %s16
      %p239 = scmp.lt.s32.totalorder %s16, 3
      %p240 = pnand %p238, %p239
      %p241 = pneg %p240
      // Predicated region
      $region45: #{mlp_classifier_forward.1} parent=5 // pred_check
        _
      $region46: #{mlp_classifier_forward.1} parent=5 // pred_check_branch
        %243 = sbr.rel (%p240) target = $region48
      $region47: #{mlp_classifier_forward.1} parent=5 // pred_region
        %s244 = ssub.s32 %s16, 1
        %p245 = scmp.lt.s32.totalorder %s21, 1
        %s246 = scalar_select %p245, %s21, 1
        %s247 = smul.addr %s246, 4
        %s248 = scalar_lea.vmem %s0, %s247
        %p249 = pneg %p42
        %p250 = pneg %p39
        %p251 = pneg %p63
        %p252 = pneg %p60
        %p253 = pneg %p84
        %p254 = pneg %p81
        %p255 = pneg %p105
        %p256 = pneg %p102
        %p257 = pneg %p126
        %p258 = pneg %p123
        %p259 = pneg %p147
        %p260 = pneg %p144
        %p261 = pneg %p168
        %p262 = pneg %p165
        %p263 = pneg %p194
        %p264 = pneg %p191
        %s265 = sand.u32 %s181, 1
        %s266 = scalar_lea.sflag [#allocation3], %s265
        %s267 = sand.u32 %s181, 1
        %s268 = smul.addr %s267, 8
        %s269 = scalar_lea.vmem [#allocation2], %s268
        %p270 = scmp.lt.s32.totalorder %s21, 1
        %s271 = scalar_select %p270, %s21, 1
        %s272 = smul.addr %s271, 4
        %s273 = scalar_lea.vmem %s0, %s272
        %v275 = vld [vmem:[%s273] sm:$0xf]
        %v276 = vld [vmem:[%s1] sm:$0xff]
        %v277 = vld [vmem:[%s1 + $0x8] sm:$0xff]
        %v278 = vld [vmem:[%s1 + $0x10] sm:$0xff]
        %v279 = vld [vmem:[%s1 + $0x18] sm:$0xff]
        %v280 = vld [vmem:[%s1 + $0x20] sm:$0xff]
        %v281 = vld [vmem:[%s1 + $0x28] sm:$0xff]
        %v282 = vld [vmem:[%s1 + $0x30] sm:$0xff]
        %v283 = vld [vmem:[%s1 + $0x38] sm:$0xff]
        %v284 = vld [vmem:[%s1 + $0x40] sm:$0xff]
        %v285 = vld [vmem:[%s1 + $0x48] sm:$0xff]
        %v286 = vld [vmem:[%s1 + $0x50] sm:$0xff]
        %v287 = vld [vmem:[%s1 + $0x58] sm:$0xff]
        %v288 = vld [vmem:[%s1 + $0x60] sm:$0xff]
        %v289 = vld [vmem:[%s1 + $0x68] sm:$0xff]
        %v290 = vld [vmem:[%s1 + $0x70] sm:$0xff]
        %v291 = vld [vmem:[%s1 + $0x78] sm:$0xff]
        %v292 = vld [vmem:[%s2] sm:$0x3]
        %v294 = vlaneseq
        %v295 = vshrl.u32 %v294, 7
        %v296 = vsub.s32 0, %v295
        %v297 = vrot.slane %v292, %v296
        %v298 = vlaneseq
        %v299 = vshrl.u32 %v298, 7
        %v300 = vsub.s32 1, %v299
        %v301 = vrot.slane %v292, %v300
        %v320 = vunpack.c.l.b16 %v276
        %v321 = vunpack.c.h.b16 %v276
        %v322 = vunpack.c.l.b16 %v277
        %v323 = vunpack.c.h.b16 %v277
        %v324 = vunpack.c.l.b16 %v278
        %v325 = vunpack.c.h.b16 %v278
        %v326 = vunpack.c.l.b16 %v279
        %v327 = vunpack.c.h.b16 %v279
        %v328 = vunpack.c.l.b16 %v280
        %v329 = vunpack.c.h.b16 %v280
        %v330 = vunpack.c.l.b16 %v281
        %v331 = vunpack.c.h.b16 %v281
        %v332 = vunpack.c.l.b16 %v282
        %v333 = vunpack.c.h.b16 %v282
        %v334 = vunpack.c.l.b16 %v283
        %v335 = vunpack.c.h.b16 %v283
        %v336 = vunpack.c.l.b16 %v284
        %v337 = vunpack.c.h.b16 %v284
        %v338 = vunpack.c.l.b16 %v285
        %v339 = vunpack.c.h.b16 %v285
        %v340 = vunpack.c.l.b16 %v286
        %v341 = vunpack.c.h.b16 %v286
        %v342 = vunpack.c.l.b16 %v287
        %v343 = vunpack.c.h.b16 %v287
        %v344 = vunpack.c.l.b16 %v288
        %v345 = vunpack.c.h.b16 %v288
        %v346 = vunpack.c.l.b16 %v289
        %v347 = vunpack.c.h.b16 %v289
        %v348 = vunpack.c.l.b16 %v290
        %v349 = vunpack.c.h.b16 %v290
        %v350 = vunpack.c.l.b16 %v291
        %v351 = vunpack.c.h.b16 %v291
        %v352 = vpack.c.b16 %v322, %v320
        %v353 = vpack.c.b16 %v323, %v321
        %v354 = vpack.c.b16 %v326, %v324
        %v355 = vpack.c.b16 %v327, %v325
        %v356 = vpack.c.b16 %v330, %v328
        %v357 = vpack.c.b16 %v331, %v329
        %v358 = vpack.c.b16 %v334, %v332
        %v359 = vpack.c.b16 %v335, %v333
        %v360 = vpack.c.b16 %v338, %v336
        %v361 = vpack.c.b16 %v339, %v337
        %v362 = vpack.c.b16 %v342, %v340
        %v363 = vpack.c.b16 %v343, %v341
        %v364 = vpack.c.b16 %v346, %v344
        %v365 = vpack.c.b16 %v347, %v345
        %v366 = vpack.c.b16 %v350, %v348
        %v367 = vpack.c.b16 %v351, %v349
        %384 = vmatprep.subr.bf16.mxu0 %v367
        %385 = vmatpush1.bf16.msra.mxu0 %v366
        %386 = vmatprep.subr.bf16.mxu0 %v365
        %387 = vmatpush1.bf16.msra.mxu0 %v364
        %388 = vmatprep.subr.bf16.mxu0 %v363
        %389 = vmatpush1.bf16.msra.mxu0 %v362
        %390 = vmatprep.subr.bf16.mxu0 %v361
        %391 = vmatpush1.bf16.msra.mxu0 %v360
        %392 = vmatprep.subr.bf16.mxu0 %v359
        %393 = vmatpush1.bf16.msra.mxu0 %v358
        %394 = vmatprep.subr.bf16.mxu0 %v357
        %395 = vmatpush1.bf16.msra.mxu0 %v356
        %396 = vmatprep.subr.bf16.mxu0 %v355
        %397 = vmatpush1.bf16.msra.mxu0 %v354
        %398 = vmatprep.subr.bf16.mxu0 %v353
        %399 = vmatpush1.bf16.msra.mxu0 %v352
        %400 = vmatprep.subr.bf16.mxu0 0
        %401 = vmatpush2.bf16.msra.mxu0 0
        %402 = vmatprep.subr.bf16.mxu0 0
        %403 = vmatpush2.bf16.msra.mxu0 0
        %404 = vmatprep.subr.bf16.mxu0 0
        %405 = vmatpush2.bf16.msra.mxu0 0
        %406 = vmatprep.subr.bf16.mxu0 0
        %407 = vmatpush2.bf16.msra.mxu0 0
        %408 = vmatprep.subr.bf16.mxu0 0
        %409 = vmatpush2.bf16.msra.mxu0 0
        %410 = vmatprep.subr.bf16.mxu0 0
        %411 = vmatpush2.bf16.msra.mxu0 0
        %412 = vmatprep.subr.bf16.mxu0 0
        %413 = vmatpush2.bf16.msra.mxu0 0
        %414 = vmatprep.subr.bf16.mxu0 0
        %415 = vmatpush2.bf16.msra.mxu0 0
        %416 = vmatprep.mubr.bf16.mxu0 0
        %417 = vmatmul.mubr.bf16.gmra.mxu0 %v275
        %v418 = vpop.f32.mrf.mxu0
        %v419 = vadd.f32 %v297, %v418
        %v420 = vpop.f32.mrf.mxu0
        %v421 = vadd.f32 %v301, %v420
        %v422 = vpop.f32.mrf.mxu0
        %v423 = vpop.f32.mrf.mxu0
        %424 = vdwg.mxu0
        %v425 = vmax.f32 %v419, 0.0
        %v426 = vmax.f32 %v421, 0.0
        %v427 = vpack.c.bf16 %v425, %v425
        %v428 = vpack.c.bf16 %v426, %v426
        %v429 = vld [vmem:[%s3] sm:$0xff]
        %v430 = vld [vmem:[%s3 + $0x8] sm:$0xff]
        %v431 = vld [vmem:[%s3 + $0x10] sm:$0xff]
        %v432 = vld [vmem:[%s3 + $0x18] sm:$0xff]
        %v433 = vld [vmem:[%s3 + $0x20] sm:$0xff]
        %v434 = vld [vmem:[%s3 + $0x28] sm:$0xff]
        %v435 = vld [vmem:[%s3 + $0x30] sm:$0xff]
        %v436 = vld [vmem:[%s3 + $0x38] sm:$0xff]
        %v437 = vld [vmem:[%s3 + $0x40] sm:$0xff]
        %v438 = vld [vmem:[%s3 + $0x48] sm:$0xff]
        %v439 = vld [vmem:[%s3 + $0x50] sm:$0xff]
        %v440 = vld [vmem:[%s3 + $0x58] sm:$0xff]
        %v441 = vld [vmem:[%s3 + $0x60] sm:$0xff]
        %v442 = vld [vmem:[%s3 + $0x68] sm:$0xff]
        %v443 = vld [vmem:[%s3 + $0x70] sm:$0xff]
        %v444 = vld [vmem:[%s3 + $0x78] sm:$0xff]
        %v445 = vld [vmem:[%s3 + $0x80] sm:$0xff]
        %v446 = vld [vmem:[%s3 + $0x88] sm:$0xff]
        %v447 = vld [vmem:[%s3 + $0x90] sm:$0xff]
        %v448 = vld [vmem:[%s3 + $0x98] sm:$0xff]
        %v449 = vld [vmem:[%s3 + $0xa0] sm:$0xff]
        %v450 = vld [vmem:[%s3 + $0xa8] sm:$0xff]
        %v451 = vld [vmem:[%s3 + $0xb0] sm:$0xff]
        %v452 = vld [vmem:[%s3 + $0xb8] sm:$0xff]
        %v453 = vld [vmem:[%s3 + $0xc0] sm:$0xff]
        %v454 = vld [vmem:[%s3 + $0xc8] sm:$0xff]
        %v455 = vld [vmem:[%s3 + $0xd0] sm:$0xff]
        %v456 = vld [vmem:[%s3 + $0xd8] sm:$0xff]
        %v457 = vld [vmem:[%s3 + $0xe0] sm:$0xff]
        %v458 = vld [vmem:[%s3 + $0xe8] sm:$0xff]
        %v459 = vld [vmem:[%s3 + $0xf0] sm:$0xff]
        %v460 = vld [vmem:[%s3 + $0xf8] sm:$0xff]
        %v461 = vld [vmem:[%s4] sm:$0x3]
        %v463 = vlaneseq
        %v464 = vshrl.u32 %v463, 7
        %v465 = vsub.s32 0, %v464
        %v466 = vrot.slane %v461, %v465
        %v467 = vlaneseq
        %v468 = vshrl.u32 %v467, 7
        %v469 = vsub.s32 1, %v468
        %v470 = vrot.slane %v461, %v469
        %v505 = vunpack.c.l.b16 %v429
        %v506 = vunpack.c.h.b16 %v429
        %v507 = vunpack.c.l.b16 %v430
        %v508 = vunpack.c.h.b16 %v430
        %v509 = vunpack.c.l.b16 %v431
        %v510 = vunpack.c.h.b16 %v431
        %v511 = vunpack.c.l.b16 %v432
        %v512 = vunpack.c.h.b16 %v432
        %v513 = vunpack.c.l.b16 %v433
        %v514 = vunpack.c.h.b16 %v433
        %v515 = vunpack.c.l.b16 %v434
        %v516 = vunpack.c.h.b16 %v434
        %v517 = vunpack.c.l.b16 %v435
        %v518 = vunpack.c.h.b16 %v435
        %v519 = vunpack.c.l.b16 %v436
        %v520 = vunpack.c.h.b16 %v436
        %v521 = vunpack.c.l.b16 %v437
        %v522 = vunpack.c.h.b16 %v437
        %v523 = vunpack.c.l.b16 %v438
        %v524 = vunpack.c.h.b16 %v438
        %v525 = vunpack.c.l.b16 %v439
        %v526 = vunpack.c.h.b16 %v439
        %v527 = vunpack.c.l.b16 %v440
        %v528 = vunpack.c.h.b16 %v440
        %v529 = vunpack.c.l.b16 %v441
        %v530 = vunpack.c.h.b16 %v441
        %v531 = vunpack.c.l.b16 %v442
        %v532 = vunpack.c.h.b16 %v442
        %v533 = vunpack.c.l.b16 %v443
        %v534 = vunpack.c.h.b16 %v443
        %v535 = vunpack.c.l.b16 %v444
        %v536 = vunpack.c.h.b16 %v444
        %v537 = vunpack.c.l.b16 %v445
        %v538 = vunpack.c.h.b16 %v445
        %v539 = vunpack.c.l.b16 %v446
        %v540 = vunpack.c.h.b16 %v446
        %v541 = vunpack.c.l.b16 %v447
        %v542 = vunpack.c.h.b16 %v447
        %v543 = vunpack.c.l.b16 %v448
        %v544 = vunpack.c.h.b16 %v448
        %v545 = vunpack.c.l.b16 %v449
        %v546 = vunpack.c.h.b16 %v449
        %v547 = vunpack.c.l.b16 %v450
        %v548 = vunpack.c.h.b16 %v450
        %v549 = vunpack.c.l.b16 %v451
        %v550 = vunpack.c.h.b16 %v451
        %v551 = vunpack.c.l.b16 %v452
        %v552 = vunpack.c.h.b16 %v452
        %v553 = vunpack.c.l.b16 %v453
        %v554 = vunpack.c.h.b16 %v453
        %v555 = vunpack.c.l.b16 %v454
        %v556 = vunpack.c.h.b16 %v454
        %v557 = vunpack.c.l.b16 %v455
        %v558 = vunpack.c.h.b16 %v455
        %v559 = vunpack.c.l.b16 %v456
        %v560 = vunpack.c.h.b16 %v456
        %v561 = vunpack.c.l.b16 %v457
        %v562 = vunpack.c.h.b16 %v457
        %v563 = vunpack.c.l.b16 %v458
        %v564 = vunpack.c.h.b16 %v458
        %v565 = vunpack.c.l.b16 %v459
        %v566 = vunpack.c.h.b16 %v459
        %v567 = vunpack.c.l.b16 %v460
        %v568 = vunpack.c.h.b16 %v460
        %v569 = vpack.c.b16 %v507, %v505
        %v570 = vpack.c.b16 %v508, %v506
        %v571 = vpack.c.b16 %v511, %v509
        %v572 = vpack.c.b16 %v512, %v510
        %v573 = vpack.c.b16 %v515, %v513
        %v574 = vpack.c.b16 %v516, %v514
        %v575 = vpack.c.b16 %v519, %v517
        %v576 = vpack.c.b16 %v520, %v518
        %v577 = vpack.c.b16 %v523, %v521
        %v578 = vpack.c.b16 %v524, %v522
        %v579 = vpack.c.b16 %v527, %v525
        %v580 = vpack.c.b16 %v528, %v526
        %v581 = vpack.c.b16 %v531, %v529
        %v582 = vpack.c.b16 %v532, %v530
        %v583 = vpack.c.b16 %v535, %v533
        %v584 = vpack.c.b16 %v536, %v534
        %v585 = vpack.c.b16 %v539, %v537
        %v586 = vpack.c.b16 %v540, %v538
        %v587 = vpack.c.b16 %v543, %v541
        %v588 = vpack.c.b16 %v544, %v542
        %v589 = vpack.c.b16 %v547, %v545
        %v590 = vpack.c.b16 %v548, %v546
        %v591 = vpack.c.b16 %v551, %v549
        %v592 = vpack.c.b16 %v552, %v550
        %v593 = vpack.c.b16 %v555, %v553
        %v594 = vpack.c.b16 %v556, %v554
        %v595 = vpack.c.b16 %v559, %v557
        %v596 = vpack.c.b16 %v560, %v558
        %v597 = vpack.c.b16 %v563, %v561
        %v598 = vpack.c.b16 %v564, %v562
        %v599 = vpack.c.b16 %v567, %v565
        %v600 = vpack.c.b16 %v568, %v566
        %633 = vmatprep.subr.bf16.mxu0 %v584
        %634 = vmatpush1.bf16.msra.mxu0 %v583
        %635 = vmatprep.subr.bf16.mxu0 %v582
        %636 = vmatpush1.bf16.msra.mxu0 %v581
        %637 = vmatprep.subr.bf16.mxu0 %v580
        %638 = vmatpush1.bf16.msra.mxu0 %v579
        %639 = vmatprep.subr.bf16.mxu0 %v578
        %640 = vmatpush1.bf16.msra.mxu0 %v577
        %641 = vmatprep.subr.bf16.mxu0 %v576
        %642 = vmatpush1.bf16.msra.mxu0 %v575
        %643 = vmatprep.subr.bf16.mxu0 %v574
        %644 = vmatpush1.bf16.msra.mxu0 %v573
        %645 = vmatprep.subr.bf16.mxu0 %v572
        %646 = vmatpush1.bf16.msra.mxu0 %v571
        %647 = vmatprep.subr.bf16.mxu0 %v570
        %648 = vmatpush1.bf16.msra.mxu0 %v569
        %649 = vmatprep.subr.bf16.mxu0 %v600
        %650 = vmatpush2.bf16.msra.mxu0 %v599
        %651 = vmatprep.subr.bf16.mxu0 %v598
        %652 = vmatpush2.bf16.msra.mxu0 %v597
        %653 = vmatprep.subr.bf16.mxu0 %v596
        %654 = vmatpush2.bf16.msra.mxu0 %v595
        %655 = vmatprep.subr.bf16.mxu0 %v594
        %656 = vmatpush2.bf16.msra.mxu0 %v593
        %657 = vmatprep.subr.bf16.mxu0 %v592
        %658 = vmatpush2.bf16.msra.mxu0 %v591
        %659 = vmatprep.subr.bf16.mxu0 %v590
        %660 = vmatpush2.bf16.msra.mxu0 %v589
        %661 = vmatprep.subr.bf16.mxu0 %v588
        %662 = vmatpush2.bf16.msra.mxu0 %v587
        %663 = vmatprep.subr.bf16.mxu0 %v586
        %664 = vmatpush2.bf16.msra.mxu0 %v585
        %665 = vmatprep.mubr.bf16.mxu0 %v428
        %666 = vmatmul.mubr.bf16.gmra.mxu0 %v427
        %v667 = vpop.f32.mrf.mxu0
        %v668 = vadd.f32 %v466, %v667
        %v669 = vpop.f32.mrf.mxu0
        %v670 = vadd.f32 %v470, %v669
        %v671 = vpop.f32.mrf.mxu0
        %v672 = vpop.f32.mrf.mxu0
        %673 = vdwg.mxu0
        %v674 = vmax.f32 %v668, 0.0
        %v675 = vmax.f32 %v670, 0.0
        %v676 = vpack.c.bf16 %v674, %v674
        %v677 = vpack.c.bf16 %v675, %v675
        %v678 = vld [vmem:[%s5] sm:$0xf]
        %v679 = vld [vmem:[%s5 + $0x4] sm:$0xf]
        %v680 = vld [vmem:[%s5 + $0x8] sm:$0xf]
        %v681 = vld [vmem:[%s5 + $0xc] sm:$0xf]
        %v682 = vld [vmem:[%s5 + $0x10] sm:$0xf]
        %v683 = vld [vmem:[%s5 + $0x14] sm:$0xf]
        %v684 = vld [vmem:[%s5 + $0x18] sm:$0xf]
        %v685 = vld [vmem:[%s5 + $0x1c] sm:$0xf]
        %v686 = vld [vmem:[%s5 + $0x20] sm:$0xf]
        %v687 = vld [vmem:[%s5 + $0x24] sm:$0xf]
        %v688 = vld [vmem:[%s5 + $0x28] sm:$0xf]
        %v689 = vld [vmem:[%s5 + $0x2c] sm:$0xf]
        %v690 = vld [vmem:[%s5 + $0x30] sm:$0xf]
        %v691 = vld [vmem:[%s5 + $0x34] sm:$0xf]
        %v692 = vld [vmem:[%s5 + $0x38] sm:$0xf]
        %v693 = vld [vmem:[%s5 + $0x3c] sm:$0xf]
        %v694 = vld [vmem:[%s5 + $0x40] sm:$0xf]
        %v695 = vld [vmem:[%s5 + $0x44] sm:$0xf]
        %v696 = vld [vmem:[%s5 + $0x48] sm:$0xf]
        %v697 = vld [vmem:[%s5 + $0x4c] sm:$0xf]
        %v698 = vld [vmem:[%s5 + $0x50] sm:$0xf]
        %v699 = vld [vmem:[%s5 + $0x54] sm:$0xf]
        %v700 = vld [vmem:[%s5 + $0x58] sm:$0xf]
        %v701 = vld [vmem:[%s5 + $0x5c] sm:$0xf]
        %v702 = vld [vmem:[%s5 + $0x60] sm:$0xf]
        %v703 = vld [vmem:[%s5 + $0x64] sm:$0xf]
        %v704 = vld [vmem:[%s5 + $0x68] sm:$0xf]
        %v705 = vld [vmem:[%s5 + $0x6c] sm:$0xf]
        %v706 = vld [vmem:[%s5 + $0x70] sm:$0xf]
        %v707 = vld [vmem:[%s5 + $0x74] sm:$0xf]
        %v708 = vld [vmem:[%s5 + $0x78] sm:$0xf]
        %v709 = vld [vmem:[%s5 + $0x7c] sm:$0xf]
        %v710 = vld [vmem:[%s6] sm:$0x1]
        %v712 = vlaneseq
        %v713 = vshrl.u32 %v712, 7
        %v714 = vsub.s32 0, %v713
        %v715 = vrot.slane %v710, %v714
        %v749 = vunpack.c.l.b16 %v678
        %v750 = vunpack.c.l.b16 %v679
        %v751 = vunpack.c.l.b16 %v680
        %v752 = vunpack.c.l.b16 %v681
        %v753 = vunpack.c.l.b16 %v682
        %v754 = vunpack.c.l.b16 %v683
        %v755 = vunpack.c.l.b16 %v684
        %v756 = vunpack.c.l.b16 %v685
        %v757 = vunpack.c.l.b16 %v686
        %v758 = vunpack.c.l.b16 %v687
        %v759 = vunpack.c.l.b16 %v688
        %v760 = vunpack.c.l.b16 %v689
        %v761 = vunpack.c.l.b16 %v690
        %v762 = vunpack.c.l.b16 %v691
        %v763 = vunpack.c.l.b16 %v692
        %v764 = vunpack.c.l.b16 %v693
        %v765 = vunpack.c.l.b16 %v694
        %v766 = vunpack.c.l.b16 %v695
        %v767 = vunpack.c.l.b16 %v696
        %v768 = vunpack.c.l.b16 %v697
        %v769 = vunpack.c.l.b16 %v698
        %v770 = vunpack.c.l.b16 %v699
        %v771 = vunpack.c.l.b16 %v700
        %v772 = vunpack.c.l.b16 %v701
        %v773 = vunpack.c.l.b16 %v702
        %v774 = vunpack.c.l.b16 %v703
        %v775 = vunpack.c.l.b16 %v704
        %v776 = vunpack.c.l.b16 %v705
        %v777 = vunpack.c.l.b16 %v706
        %v778 = vunpack.c.l.b16 %v707
        %v779 = vunpack.c.l.b16 %v708
        %v780 = vunpack.c.l.b16 %v709
        %v781 = vpack.c.b16 %v750, %v749
        %v782 = vpack.c.b16 %v752, %v751
        %v783 = vpack.c.b16 %v754, %v753
        %v784 = vpack.c.b16 %v756, %v755
        %v785 = vpack.c.b16 %v758, %v757
        %v786 = vpack.c.b16 %v760, %v759
        %v787 = vpack.c.b16 %v762, %v761
        %v788 = vpack.c.b16 %v764, %v763
        %v789 = vpack.c.b16 %v766, %v765
        %v790 = vpack.c.b16 %v768, %v767
        %v791 = vpack.c.b16 %v770, %v769
        %v792 = vpack.c.b16 %v772, %v771
        %v793 = vpack.c.b16 %v774, %v773
        %v794 = vpack.c.b16 %v776, %v775
        %v795 = vpack.c.b16 %v778, %v777
        %v796 = vpack.c.b16 %v780, %v779
        %813 = vmatprep.subr.bf16.mxu0 0
        %814 = vmatpush1.bf16.msra.mxu0 %v788
        %815 = vmatprep.subr.bf16.mxu0 0
        %816 = vmatpush1.bf16.msra.mxu0 %v787
        %817 = vmatprep.subr.bf16.mxu0 0
        %818 = vmatpush1.bf16.msra.mxu0 %v786
        %819 = vmatprep.subr.bf16.mxu0 0
        %820 = vmatpush1.bf16.msra.mxu0 %v785
        %821 = vmatprep.subr.bf16.mxu0 0
        %822 = vmatpush1.bf16.msra.mxu0 %v784
        %823 = vmatprep.subr.bf16.mxu0 0
        %824 = vmatpush1.bf16.msra.mxu0 %v783
        %825 = vmatprep.subr.bf16.mxu0 0
        %826 = vmatpush1.bf16.msra.mxu0 %v782
        %827 = vmatprep.subr.bf16.mxu0 0
        %828 = vmatpush1.bf16.msra.mxu0 %v781
        %829 = vmatprep.subr.bf16.mxu0 0
        %830 = vmatpush2.bf16.msra.mxu0 %v796
        %831 = vmatprep.subr.bf16.mxu0 0
        %832 = vmatpush2.bf16.msra.mxu0 %v795
        %833 = vmatprep.subr.bf16.mxu0 0
        %834 = vmatpush2.bf16.msra.mxu0 %v794
        %835 = vmatprep.subr.bf16.mxu0 0
        %836 = vmatpush2.bf16.msra.mxu0 %v793
        %837 = vmatprep.subr.bf16.mxu0 0
        %838 = vmatpush2.bf16.msra.mxu0 %v792
        %839 = vmatprep.subr.bf16.mxu0 0
        %840 = vmatpush2.bf16.msra.mxu0 %v791
        %841 = vmatprep.subr.bf16.mxu0 0
        %842 = vmatpush2.bf16.msra.mxu0 %v790
        %843 = vmatprep.subr.bf16.mxu0 0
        %844 = vmatpush2.bf16.msra.mxu0 %v789
        %845 = vmatprep.mubr.bf16.mxu0 %v677
        %846 = vmatmul.mubr.bf16.gmra.mxu0 %v676
        %v847 = vpop.f32.mrf.mxu0
        %v848 = vadd.f32 %v715, %v847
        %v849 = vpop.f32.mrf.mxu0
        %v850 = vpop.f32.mrf.mxu0
        %v851 = vpop.f32.mrf.mxu0
        %852 = vdwg.mxu0
        %853 = vst [vmem:[%s269] sm:$0xff] %v848
        %s854 = sand.u32 %s181, 1
        %s855 = scalar_lea.sflag [#allocation3], %s854
        %s856 = sand.u32 %s181, 1
        %s857 = smul.addr %s856, 8
        %s858 = scalar_lea.vmem [#allocation2], %s857
        // Predicated region
        $region49: #{mlp_classifier_forward.1} parent=47 // pred_check
          %p859 = pneg %p191
        $region50: #{mlp_classifier_forward.1} parent=47 // pred_check_branch
          %861 = sbr.rel (%p859) target = $region52
        $region51: #{mlp_classifier_forward.1} parent=47 // pred_region
          %s863 = ssub.s32 128, 128
          %864 = vsyncadd %s855, %s863
          %s865 = smul.addr %s21, 128
          %s866 = scalar_lea.hbm %s7, %s865
          %s868 = sshll.u32 %s858, 4
          %s869 = int_to_ptr.vmem [resolvable:$true] %s868
          %871 = dma.vmem_to_hbm [thread:$0]  %s869, 128, %s866, %s855
        $region52: #{mlp_classifier_forward.1} parent=47 // pred_fallthru
          _
      $region48: #{mlp_classifier_forward.1} parent=5 // pred_fallthru
        _
      %p872 = scmp.le.s32.totalorder 2, %s16
      // Predicated region
      $region53: #{mlp_classifier_forward.1} parent=5 // pred_check
        %p873 = pneg %p872
      $region54: #{mlp_classifier_forward.1} parent=5 // pred_check_branch
        %875 = sbr.rel (%p873) target = $region56
      $region55: #{mlp_classifier_forward.1} parent=5 // pred_region
        %s876 = ssub.s32 %s16, 2
        // Predicated region
        $region57: #{mlp_classifier_forward.1} parent=55 // pred_check
          %p877 = pneg %p197
        $region58: #{mlp_classifier_forward.1} parent=55 // pred_check_branch
          %879 = sbr.rel (%p877) target = $region60
        $region59: #{mlp_classifier_forward.1} parent=55 // pred_region
          %s880 = sand.u32 %s182, 1
          %s881 = scalar_lea.sflag [#allocation3], %s880
          %s882 = sand.u32 %s182, 1
          %s883 = smul.addr %s882, 8
          %s884 = scalar_lea.vmem [#allocation2], %s883
          %885 = dma.done %s881, 128
        $region60: #{mlp_classifier_forward.1} parent=55 // pred_fallthru
          _
      $region56: #{mlp_classifier_forward.1} parent=5 // pred_fallthru
        _
    $region6: #{mlp_classifier_forward.1} parent=1 // loop_footer
      %s20 = sadd.s32 1, %s16
    $region7: #{mlp_classifier_forward.1} parent=1 // loop_footer_branch
      %15 = sbr.rel target = $region3
    $region8: #{mlp_classifier_forward.1} parent=1 // loop_exit
      _
    %886 = vsyncpa [#allocation3], 1
    %s887 = scalar_lea.sflag [#allocation3], 1
    %888 = vsyncpa %s887, 1

</llo_original>
